<compile_context>
chip_gen: v7x
topology: tpu7x:2x2x1
jax: 0.10.0
libtpu: 0.0.40
codegen_flags: <defaults>
</compile_context>

<pallas_src>
import functools

import jax
import jax.numpy as jnp
from jax.experimental import pallas as pl
from jax.experimental.pallas import tpu as pltpu

HIDDEN_LAYER_NUMBER = 4
BN_EPS = 1e-5
LANE = 128


def critic_kernel(state_ref, action_ref, w_s_ref, w_a_ref, b_in_ref,
                  w_h_ref, b_h_ref, gamma_ref, beta_ref,
                  w_out_ref, b_out_ref, o_ref):
    batch = state_ref.shape[0]
    inv_b = jnp.float32(1.0 / batch)

    # Input layer with fused concat: state @ Ws + action @ Wa + b, then ReLU.
    h = jnp.dot(state_ref[...], w_s_ref[...], preferred_element_type=jnp.float32)
    h = h + jnp.dot(action_ref[...], w_a_ref[...],
                    preferred_element_type=jnp.float32)
    h = jnp.maximum(h + b_in_ref[...], 0.0)

    # Hidden stack: Linear -> BatchNorm1d (single-pass batch stats) -> ReLU.
    for i in range(HIDDEN_LAYER_NUMBER):
        y = jnp.dot(h, w_h_ref[i], preferred_element_type=jnp.float32)
        y = y + b_h_ref[i]
        s1 = jnp.sum(y, axis=0, keepdims=True)        # [1, Hp]
        s2 = jnp.sum(y * y, axis=0, keepdims=True)    # independent reduction
        mu = s1 * inv_b
        var = s2 * inv_b - mu * mu                    # biased batch variance
        y_hat = (y - mu) * jax.lax.rsqrt(var + BN_EPS)
        h = jnp.maximum(y_hat * gamma_ref[i] + beta_ref[i], 0.0)

    # Output layer (lane-dense padded store; real columns sliced in wrapper).
    out = jnp.dot(h, w_out_ref[...], preferred_element_type=jnp.float32)
    o_ref[...] = (out + b_out_ref[...]).astype(o_ref.dtype)


@functools.partial(jax.jit, static_argnames=("output_size",))
def critic_forward(state, action, packed, *, output_size):
    batch = state.shape[0]
    in_s, in_a = state.shape[1], action.shape[1]
    n_layers, _, hp = packed["w_h"].shape[0], packed["w_h"].shape[1], packed["w_h"].shape[2]
    outp = packed["w_out"].shape[1]

    args = (state, action,
            packed["w_s"], packed["w_a"], packed["b_in"],
            packed["w_h"], packed["b_h"], packed["gamma"], packed["beta"],
            packed["w_out"], packed["b_out"])

    # Advisory cost estimate (MXU flops, EUP rsqrts, HBM traffic).
    flops = 2 * batch * ((in_s + in_a) * hp + n_layers * hp * hp + hp * outp)
    transcendentals = n_layers * hp
    bytes_accessed = int(sum(a.size * a.dtype.itemsize for a in args)
                         + batch * outp * 4)

    vmem_spec = pl.BlockSpec(memory_space=pltpu.MemorySpace.VMEM)
    out_padded = pl.pallas_call(
        critic_kernel,
        out_shape=jax.ShapeDtypeStruct((batch, outp), jnp.float32),
        in_specs=[vmem_spec] * len(args),
        out_specs=vmem_spec,
        cost_estimate=pl.CostEstimate(flops=flops,
                                      transcendentals=transcendentals,
                                      bytes_accessed=bytes_accessed),
    )(*args)
    return out_padded[:, :output_size]


def init_critic_params(key, input_size, hidden_size, output_size,
                       hidden_layer_number=HIDDEN_LAYER_NUMBER):
    """Deterministic PyTorch-Linear-style init (uniform +-1/sqrt(fan_in))."""
    keys = jax.random.split(key, 2 * (hidden_layer_number + 2))

    def linear(kw, kb, fan_in, fan_out):
        bound = 1.0 / jnp.sqrt(jnp.float32(fan_in))
        # weights stored as [in, out] (transposed vs. torch's [out, in])
        w = jax.random.uniform(kw, (fan_in, fan_out), jnp.float32, -bound, bound)
        b = jax.random.uniform(kb, (1, fan_out), jnp.float32, -bound, bound)
        return w, b

    w_in, b_in = linear(keys[0], keys[1], input_size, hidden_size)

    w_h, b_h = [], []
    for i in range(hidden_layer_number):
        w, b = linear(keys[2 + 2 * i], keys[3 + 2 * i], hidden_size, hidden_size)
        w_h.append(w)
        b_h.append(b)
    w_h = jnp.stack(w_h)                     # [L, H, H]
    b_h = jnp.stack(b_h)                     # [L, 1, H]

    w_out, b_out = linear(keys[-2], keys[-1], hidden_size, output_size)

    # BatchNorm1d affine params: weight=1, bias=0 (PyTorch default init).
    gamma = jnp.ones((hidden_layer_number, 1, hidden_size), jnp.float32)
    beta = jnp.zeros((hidden_layer_number, 1, hidden_size), jnp.float32)

    return dict(w_in=w_in, b_in=b_in, w_h=w_h, b_h=b_h,
                gamma=gamma, beta=beta, w_out=w_out, b_out=b_out)


def pack_critic_params(params, state_size, lane=LANE):
    """One-time, off-hot-path re-layout: split the input weight (fused concat)
    and zero-pad every feature dim to a multiple of 128 lanes.  Padded biases
    and beta are exactly 0, so padded lanes stay 0 through Linear->BN->ReLU."""

    def round_up(n, m):
        return ((n + m - 1) // m) * m

    def pad_axis(x, axis, target, value=0.0):
        pad = target - x.shape[axis]
        if pad <= 0:
            return x
        widths = [(0, 0)] * x.ndim
        widths[axis] = (0, pad)
        return jnp.pad(x, widths, constant_values=value)

    hidden = params["w_in"].shape[1]
    out_size = params["w_out"].shape[1]
    hp = round_up(hidden, lane)
    outp = round_up(out_size, lane)

    w_in = params["w_in"]
    return dict(
        w_s=pad_axis(w_in[:state_size], 1, hp),        # [S, Hp]
        w_a=pad_axis(w_in[state_size:], 1, hp),        # [A, Hp]
        b_in=pad_axis(params["b_in"], 1, hp),          # [1, Hp]
        w_h=pad_axis(pad_axis(params["w_h"], 2, hp), 1, hp),   # [L, Hp, Hp]
        b_h=pad_axis(params["b_h"], 2, hp),            # [L, 1, Hp]
        gamma=pad_axis(params["gamma"], 2, hp, value=1.0),
        beta=pad_axis(params["beta"], 2, hp),          # padded beta MUST be 0
        w_out=pad_axis(pad_axis(params["w_out"], 0, hp), 1, outp),  # [Hp, OUTp]
        b_out=pad_axis(params["b_out"], 1, outp),      # [1, OUTp]
    )


def critic_reference(state, action, params):
    """Pure-JAX reference (unpadded, two-pass BN) for correctness check."""
    x = jnp.concatenate([state, action], axis=1)
    h = jnp.maximum(x @ params["w_in"] + params["b_in"], 0.0)
    for i in range(HIDDEN_LAYER_NUMBER):
        y = h @ params["w_h"][i] + params["b_h"][i]
        mu = jnp.mean(y, axis=0, keepdims=True)
        var = jnp.mean((y - mu) ** 2, axis=0, keepdims=True)
        y_hat = (y - mu) / jnp.sqrt(var + BN_EPS)
        h = jnp.maximum(y_hat * params["gamma"][i] + params["beta"][i], 0.0)
    return h @ params["w_out"] + params["b_out"]


if __name__ == "__main__":
    key = jax.random.PRNGKey(0)
    k_param, k_state, k_action = jax.random.split(key, 3)

    batch = 8
    state_size, action_size = 12, 4
    input_size = state_size + action_size      # 16
    hidden_size = 32
    output_size = 1

    params = init_critic_params(k_param, input_size, hidden_size, output_size)
    packed = pack_critic_params(params, state_size)        # one-time re-layout
    packed = jax.tree_util.tree_map(jax.block_until_ready, packed)

    state = jax.random.normal(k_state, (batch, state_size), jnp.float32)
    action = jax.random.normal(k_action, (batch, action_size), jnp.float32)

    out = critic_forward(state, action, packed, output_size=output_size)
    out = jax.block_until_ready(out)

    ref = critic_reference(state, action, params)
    assert out.shape == (batch, output_size)
    assert jnp.allclose(out, ref, atol=1e-4, rtol=1e-4), "mismatch vs reference"

    print("KERNEL_OK")
</pallas_src>

<mosaic_0001>
module attributes {stable_mosaic.version = 11 : i64} {
  func.func @critic_kernel(%arg0: memref<8x12xf32, #tpu.memory_space<vmem>>, %arg1: memref<8x4xf32, #tpu.memory_space<vmem>>, %arg2: memref<12x128xf32, #tpu.memory_space<vmem>>, %arg3: memref<4x128xf32, #tpu.memory_space<vmem>>, %arg4: memref<1x128xf32, #tpu.memory_space<vmem>>, %arg5: memref<4x128x128xf32, #tpu.memory_space<vmem>>, %arg6: memref<4x1x128xf32, #tpu.memory_space<vmem>>, %arg7: memref<4x1x128xf32, #tpu.memory_space<vmem>>, %arg8: memref<4x1x128xf32, #tpu.memory_space<vmem>>, %arg9: memref<128x128xf32, #tpu.memory_space<vmem>>, %arg10: memref<1x128xf32, #tpu.memory_space<vmem>>, %arg11: memref<8x128xf32, #tpu.memory_space<vmem>>) attributes {dimension_semantics = [], scalar_prefetch = 0 : i64, scratch_operands = 0 : i64, tpu.core_type = #tpu.core_type<tc>} {
    %c0 = arith.constant 0 : index
    %c0_0 = arith.constant 0 : index
    %0 = vector.load %arg0[%c0, %c0_0] : memref<8x12xf32, #tpu.memory_space<vmem>>, vector<8x12xf32>
    %c0_1 = arith.constant 0 : index
    %c0_2 = arith.constant 0 : index
    %1 = vector.load %arg2[%c0_1, %c0_2] : memref<12x128xf32, #tpu.memory_space<vmem>>, vector<12x128xf32>
    %cst = arith.constant dense<0.000000e+00> : vector<8x128xf32>
    %2 = tpu.matmul %0, %1, %cst {dimension_numbers = #tpu.dot_dimension_numbers<[1], [0], [0], [1], [0, 0, 1, 1], [], []>} : vector<8x12xf32>, vector<12x128xf32>, vector<8x128xf32> -> vector<8x128xf32>
    %c0_3 = arith.constant 0 : index
    %c0_4 = arith.constant 0 : index
    %3 = vector.load %arg1[%c0_3, %c0_4] : memref<8x4xf32, #tpu.memory_space<vmem>>, vector<8x4xf32>
    %c0_5 = arith.constant 0 : index
    %c0_6 = arith.constant 0 : index
    %4 = vector.load %arg3[%c0_5, %c0_6] : memref<4x128xf32, #tpu.memory_space<vmem>>, vector<4x128xf32>
    %cst_7 = arith.constant dense<0.000000e+00> : vector<8x128xf32>
    %5 = tpu.matmul %3, %4, %cst_7 {dimension_numbers = #tpu.dot_dimension_numbers<[1], [0], [0], [1], [0, 0, 1, 1], [], []>} : vector<8x4xf32>, vector<4x128xf32>, vector<8x128xf32> -> vector<8x128xf32>
    %6 = arith.addf %2, %5 : vector<8x128xf32>
    %c0_8 = arith.constant 0 : index
    %c0_9 = arith.constant 0 : index
    %7 = vector.load %arg4[%c0_8, %c0_9] : memref<1x128xf32, #tpu.memory_space<vmem>>, vector<1x128xf32>
    %8 = vector.broadcast %7 : vector<1x128xf32> to vector<8x128xf32>
    %9 = arith.addf %6, %8 : vector<8x128xf32>
    %cst_10 = arith.constant 0.000000e+00 : f32
    %10 = vector.broadcast %cst_10 : f32 to vector<8x128xf32>
    %11 = arith.maximumf %9, %10 : vector<8x128xf32>
    %c0_11 = arith.constant 0 : index
    %c0_12 = arith.constant 0 : index
    %c0_13 = arith.constant 0 : index
    %12 = vector.load %arg5[%c0_11, %c0_12, %c0_13] : memref<4x128x128xf32, #tpu.memory_space<vmem>>, vector<1x128x128xf32>
    %13 = vector.shape_cast %12 : vector<1x128x128xf32> to vector<128x128xf32>
    %cst_14 = arith.constant dense<0.000000e+00> : vector<8x128xf32>
    %14 = tpu.matmul %11, %13, %cst_14 {dimension_numbers = #tpu.dot_dimension_numbers<[1], [0], [0], [1], [0, 0, 1, 1], [], []>} : vector<8x128xf32>, vector<128x128xf32>, vector<8x128xf32> -> vector<8x128xf32>
    %c0_15 = arith.constant 0 : index
    %c0_16 = arith.constant 0 : index
    %c0_17 = arith.constant 0 : index
    %15 = vector.load %arg6[%c0_15, %c0_16, %c0_17] : memref<4x1x128xf32, #tpu.memory_space<vmem>>, vector<1x1x128xf32>
    %16 = vector.shape_cast %15 : vector<1x1x128xf32> to vector<1x128xf32>
    %17 = vector.broadcast %16 : vector<1x128xf32> to vector<8x128xf32>
    %18 = arith.addf %14, %17 : vector<8x128xf32>
    %cst_18 = arith.constant dense<0.000000e+00> : vector<128xf32>
    %19 = vector.multi_reduction <add>, %18, %cst_18 [0] : vector<8x128xf32> to vector<128xf32>
    %20 = vector.shape_cast %19 : vector<128xf32> to vector<1x128xf32>
    %21 = arith.mulf %18, %18 : vector<8x128xf32>
    %cst_19 = arith.constant dense<0.000000e+00> : vector<128xf32>
    %22 = vector.multi_reduction <add>, %21, %cst_19 [0] : vector<8x128xf32> to vector<128xf32>
    %23 = vector.shape_cast %22 : vector<128xf32> to vector<1x128xf32>
    %cst_20 = arith.constant 1.250000e-01 : f32
    %24 = vector.broadcast %cst_20 : f32 to vector<1x128xf32>
    %25 = arith.mulf %20, %24 : vector<1x128xf32>
    %cst_21 = arith.constant 1.250000e-01 : f32
    %26 = vector.broadcast %cst_21 : f32 to vector<1x128xf32>
    %27 = arith.mulf %23, %26 : vector<1x128xf32>
    %28 = arith.mulf %25, %25 : vector<1x128xf32>
    %29 = arith.subf %27, %28 : vector<1x128xf32>
    %30 = vector.broadcast %25 : vector<1x128xf32> to vector<8x128xf32>
    %31 = arith.subf %18, %30 : vector<8x128xf32>
    %cst_22 = arith.constant 9.99999974E-6 : f32
    %32 = vector.broadcast %cst_22 : f32 to vector<1x128xf32>
    %33 = arith.addf %29, %32 : vector<1x128xf32>
    %34 = math.rsqrt %33 : vector<1x128xf32>
    %35 = vector.broadcast %34 : vector<1x128xf32> to vector<8x128xf32>
    %36 = arith.mulf %31, %35 : vector<8x128xf32>
    %c0_23 = arith.constant 0 : index
    %c0_24 = arith.constant 0 : index
    %c0_25 = arith.constant 0 : index
    %37 = vector.load %arg7[%c0_23, %c0_24, %c0_25] : memref<4x1x128xf32, #tpu.memory_space<vmem>>, vector<1x1x128xf32>
    %38 = vector.shape_cast %37 : vector<1x1x128xf32> to vector<1x128xf32>
    %39 = vector.broadcast %38 : vector<1x128xf32> to vector<8x128xf32>
    %40 = arith.mulf %36, %39 : vector<8x128xf32>
    %c0_26 = arith.constant 0 : index
    %c0_27 = arith.constant 0 : index
    %c0_28 = arith.constant 0 : index
    %41 = vector.load %arg8[%c0_26, %c0_27, %c0_28] : memref<4x1x128xf32, #tpu.memory_space<vmem>>, vector<1x1x128xf32>
    %42 = vector.shape_cast %41 : vector<1x1x128xf32> to vector<1x128xf32>
    %43 = vector.broadcast %42 : vector<1x128xf32> to vector<8x128xf32>
    %44 = arith.addf %40, %43 : vector<8x128xf32>
    %cst_29 = arith.constant 0.000000e+00 : f32
    %45 = vector.broadcast %cst_29 : f32 to vector<8x128xf32>
    %46 = arith.maximumf %44, %45 : vector<8x128xf32>
    %c1 = arith.constant 1 : index
    %c0_30 = arith.constant 0 : index
    %c0_31 = arith.constant 0 : index
    %47 = vector.load %arg5[%c1, %c0_30, %c0_31] : memref<4x128x128xf32, #tpu.memory_space<vmem>>, vector<1x128x128xf32>
    %48 = vector.shape_cast %47 : vector<1x128x128xf32> to vector<128x128xf32>
    %cst_32 = arith.constant dense<0.000000e+00> : vector<8x128xf32>
    %49 = tpu.matmul %46, %48, %cst_32 {dimension_numbers = #tpu.dot_dimension_numbers<[1], [0], [0], [1], [0, 0, 1, 1], [], []>} : vector<8x128xf32>, vector<128x128xf32>, vector<8x128xf32> -> vector<8x128xf32>
    %c1_33 = arith.constant 1 : index
    %c0_34 = arith.constant 0 : index
    %c0_35 = arith.constant 0 : index
    %50 = vector.load %arg6[%c1_33, %c0_34, %c0_35] : memref<4x1x128xf32, #tpu.memory_space<vmem>>, vector<1x1x128xf32>
    %51 = vector.shape_cast %50 : vector<1x1x128xf32> to vector<1x128xf32>
    %52 = vector.broadcast %51 : vector<1x128xf32> to vector<8x128xf32>
    %53 = arith.addf %49, %52 : vector<8x128xf32>
    %cst_36 = arith.constant dense<0.000000e+00> : vector<128xf32>
    %54 = vector.multi_reduction <add>, %53, %cst_36 [0] : vector<8x128xf32> to vector<128xf32>
    %55 = vector.shape_cast %54 : vector<128xf32> to vector<1x128xf32>
    %56 = arith.mulf %53, %53 : vector<8x128xf32>
    %cst_37 = arith.constant dense<0.000000e+00> : vector<128xf32>
    %57 = vector.multi_reduction <add>, %56, %cst_37 [0] : vector<8x128xf32> to vector<128xf32>
    %58 = vector.shape_cast %57 : vector<128xf32> to vector<1x128xf32>
    %cst_38 = arith.constant 1.250000e-01 : f32
    %59 = vector.broadcast %cst_38 : f32 to vector<1x128xf32>
    %60 = arith.mulf %55, %59 : vector<1x128xf32>
    %cst_39 = arith.constant 1.250000e-01 : f32
    %61 = vector.broadcast %cst_39 : f32 to vector<1x128xf32>
    %62 = arith.mulf %58, %61 : vector<1x128xf32>
    %63 = arith.mulf %60, %60 : vector<1x128xf32>
    %64 = arith.subf %62, %63 : vector<1x128xf32>
    %65 = vector.broadcast %60 : vector<1x128xf32> to vector<8x128xf32>
    %66 = arith.subf %53, %65 : vector<8x128xf32>
    %cst_40 = arith.constant 9.99999974E-6 : f32
    %67 = vector.broadcast %cst_40 : f32 to vector<1x128xf32>
    %68 = arith.addf %64, %67 : vector<1x128xf32>
    %69 = math.rsqrt %68 : vector<1x128xf32>
    %70 = vector.broadcast %69 : vector<1x128xf32> to vector<8x128xf32>
    %71 = arith.mulf %66, %70 : vector<8x128xf32>
    %c1_41 = arith.constant 1 : index
    %c0_42 = arith.constant 0 : index
    %c0_43 = arith.constant 0 : index
    %72 = vector.load %arg7[%c1_41, %c0_42, %c0_43] : memref<4x1x128xf32, #tpu.memory_space<vmem>>, vector<1x1x128xf32>
    %73 = vector.shape_cast %72 : vector<1x1x128xf32> to vector<1x128xf32>
    %74 = vector.broadcast %73 : vector<1x128xf32> to vector<8x128xf32>
    %75 = arith.mulf %71, %74 : vector<8x128xf32>
    %c1_44 = arith.constant 1 : index
    %c0_45 = arith.constant 0 : index
    %c0_46 = arith.constant 0 : index
    %76 = vector.load %arg8[%c1_44, %c0_45, %c0_46] : memref<4x1x128xf32, #tpu.memory_space<vmem>>, vector<1x1x128xf32>
    %77 = vector.shape_cast %76 : vector<1x1x128xf32> to vector<1x128xf32>
    %78 = vector.broadcast %77 : vector<1x128xf32> to vector<8x128xf32>
    %79 = arith.addf %75, %78 : vector<8x128xf32>
    %cst_47 = arith.constant 0.000000e+00 : f32
    %80 = vector.broadcast %cst_47 : f32 to vector<8x128xf32>
    %81 = arith.maximumf %79, %80 : vector<8x128xf32>
    %c2 = arith.constant 2 : index
    %c0_48 = arith.constant 0 : index
    %c0_49 = arith.constant 0 : index
    %82 = vector.load %arg5[%c2, %c0_48, %c0_49] : memref<4x128x128xf32, #tpu.memory_space<vmem>>, vector<1x128x128xf32>
    %83 = vector.shape_cast %82 : vector<1x128x128xf32> to vector<128x128xf32>
    %cst_50 = arith.constant dense<0.000000e+00> : vector<8x128xf32>
    %84 = tpu.matmul %81, %83, %cst_50 {dimension_numbers = #tpu.dot_dimension_numbers<[1], [0], [0], [1], [0, 0, 1, 1], [], []>} : vector<8x128xf32>, vector<128x128xf32>, vector<8x128xf32> -> vector<8x128xf32>
    %c2_51 = arith.constant 2 : index
    %c0_52 = arith.constant 0 : index
    %c0_53 = arith.constant 0 : index
    %85 = vector.load %arg6[%c2_51, %c0_52, %c0_53] : memref<4x1x128xf32, #tpu.memory_space<vmem>>, vector<1x1x128xf32>
    %86 = vector.shape_cast %85 : vector<1x1x128xf32> to vector<1x128xf32>
    %87 = vector.broadcast %86 : vector<1x128xf32> to vector<8x128xf32>
    %88 = arith.addf %84, %87 : vector<8x128xf32>
    %cst_54 = arith.constant dense<0.000000e+00> : vector<128xf32>
    %89 = vector.multi_reduction <add>, %88, %cst_54 [0] : vector<8x128xf32> to vector<128xf32>
    %90 = vector.shape_cast %89 : vector<128xf32> to vector<1x128xf32>
    %91 = arith.mulf %88, %88 : vector<8x128xf32>
    %cst_55 = arith.constant dense<0.000000e+00> : vector<128xf32>
    %92 = vector.multi_reduction <add>, %91, %cst_55 [0] : vector<8x128xf32> to vector<128xf32>
    %93 = vector.shape_cast %92 : vector<128xf32> to vector<1x128xf32>
    %cst_56 = arith.constant 1.250000e-01 : f32
    %94 = vector.broadcast %cst_56 : f32 to vector<1x128xf32>
    %95 = arith.mulf %90, %94 : vector<1x128xf32>
    %cst_57 = arith.constant 1.250000e-01 : f32
    %96 = vector.broadcast %cst_57 : f32 to vector<1x128xf32>
    %97 = arith.mulf %93, %96 : vector<1x128xf32>
    %98 = arith.mulf %95, %95 : vector<1x128xf32>
    %99 = arith.subf %97, %98 : vector<1x128xf32>
    %100 = vector.broadcast %95 : vector<1x128xf32> to vector<8x128xf32>
    %101 = arith.subf %88, %100 : vector<8x128xf32>
    %cst_58 = arith.constant 9.99999974E-6 : f32
    %102 = vector.broadcast %cst_58 : f32 to vector<1x128xf32>
    %103 = arith.addf %99, %102 : vector<1x128xf32>
    %104 = math.rsqrt %103 : vector<1x128xf32>
    %105 = vector.broadcast %104 : vector<1x128xf32> to vector<8x128xf32>
    %106 = arith.mulf %101, %105 : vector<8x128xf32>
    %c2_59 = arith.constant 2 : index
    %c0_60 = arith.constant 0 : index
    %c0_61 = arith.constant 0 : index
    %107 = vector.load %arg7[%c2_59, %c0_60, %c0_61] : memref<4x1x128xf32, #tpu.memory_space<vmem>>, vector<1x1x128xf32>
    %108 = vector.shape_cast %107 : vector<1x1x128xf32> to vector<1x128xf32>
    %109 = vector.broadcast %108 : vector<1x128xf32> to vector<8x128xf32>
    %110 = arith.mulf %106, %109 : vector<8x128xf32>
    %c2_62 = arith.constant 2 : index
    %c0_63 = arith.constant 0 : index
    %c0_64 = arith.constant 0 : index
    %111 = vector.load %arg8[%c2_62, %c0_63, %c0_64] : memref<4x1x128xf32, #tpu.memory_space<vmem>>, vector<1x1x128xf32>
    %112 = vector.shape_cast %111 : vector<1x1x128xf32> to vector<1x128xf32>
    %113 = vector.broadcast %112 : vector<1x128xf32> to vector<8x128xf32>
    %114 = arith.addf %110, %113 : vector<8x128xf32>
    %cst_65 = arith.constant 0.000000e+00 : f32
    %115 = vector.broadcast %cst_65 : f32 to vector<8x128xf32>
    %116 = arith.maximumf %114, %115 : vector<8x128xf32>
    %c3 = arith.constant 3 : index
    %c0_66 = arith.constant 0 : index
    %c0_67 = arith.constant 0 : index
    %117 = vector.load %arg5[%c3, %c0_66, %c0_67] : memref<4x128x128xf32, #tpu.memory_space<vmem>>, vector<1x128x128xf32>
    %118 = vector.shape_cast %117 : vector<1x128x128xf32> to vector<128x128xf32>
    %cst_68 = arith.constant dense<0.000000e+00> : vector<8x128xf32>
    %119 = tpu.matmul %116, %118, %cst_68 {dimension_numbers = #tpu.dot_dimension_numbers<[1], [0], [0], [1], [0, 0, 1, 1], [], []>} : vector<8x128xf32>, vector<128x128xf32>, vector<8x128xf32> -> vector<8x128xf32>
    %c3_69 = arith.constant 3 : index
    %c0_70 = arith.constant 0 : index
    %c0_71 = arith.constant 0 : index
    %120 = vector.load %arg6[%c3_69, %c0_70, %c0_71] : memref<4x1x128xf32, #tpu.memory_space<vmem>>, vector<1x1x128xf32>
    %121 = vector.shape_cast %120 : vector<1x1x128xf32> to vector<1x128xf32>
    %122 = vector.broadcast %121 : vector<1x128xf32> to vector<8x128xf32>
    %123 = arith.addf %119, %122 : vector<8x128xf32>
    %cst_72 = arith.constant dense<0.000000e+00> : vector<128xf32>
    %124 = vector.multi_reduction <add>, %123, %cst_72 [0] : vector<8x128xf32> to vector<128xf32>
    %125 = vector.shape_cast %124 : vector<128xf32> to vector<1x128xf32>
    %126 = arith.mulf %123, %123 : vector<8x128xf32>
    %cst_73 = arith.constant dense<0.000000e+00> : vector<128xf32>
    %127 = vector.multi_reduction <add>, %126, %cst_73 [0] : vector<8x128xf32> to vector<128xf32>
    %128 = vector.shape_cast %127 : vector<128xf32> to vector<1x128xf32>
    %cst_74 = arith.constant 1.250000e-01 : f32
    %129 = vector.broadcast %cst_74 : f32 to vector<1x128xf32>
    %130 = arith.mulf %125, %129 : vector<1x128xf32>
    %cst_75 = arith.constant 1.250000e-01 : f32
    %131 = vector.broadcast %cst_75 : f32 to vector<1x128xf32>
    %132 = arith.mulf %128, %131 : vector<1x128xf32>
    %133 = arith.mulf %130, %130 : vector<1x128xf32>
    %134 = arith.subf %132, %133 : vector<1x128xf32>
    %135 = vector.broadcast %130 : vector<1x128xf32> to vector<8x128xf32>
    %136 = arith.subf %123, %135 : vector<8x128xf32>
    %cst_76 = arith.constant 9.99999974E-6 : f32
    %137 = vector.broadcast %cst_76 : f32 to vector<1x128xf32>
    %138 = arith.addf %134, %137 : vector<1x128xf32>
    %139 = math.rsqrt %138 : vector<1x128xf32>
    %140 = vector.broadcast %139 : vector<1x128xf32> to vector<8x128xf32>
    %141 = arith.mulf %136, %140 : vector<8x128xf32>
    %c3_77 = arith.constant 3 : index
    %c0_78 = arith.constant 0 : index
    %c0_79 = arith.constant 0 : index
    %142 = vector.load %arg7[%c3_77, %c0_78, %c0_79] : memref<4x1x128xf32, #tpu.memory_space<vmem>>, vector<1x1x128xf32>
    %143 = vector.shape_cast %142 : vector<1x1x128xf32> to vector<1x128xf32>
    %144 = vector.broadcast %143 : vector<1x128xf32> to vector<8x128xf32>
    %145 = arith.mulf %141, %144 : vector<8x128xf32>
    %c3_80 = arith.constant 3 : index
    %c0_81 = arith.constant 0 : index
    %c0_82 = arith.constant 0 : index
    %146 = vector.load %arg8[%c3_80, %c0_81, %c0_82] : memref<4x1x128xf32, #tpu.memory_space<vmem>>, vector<1x1x128xf32>
    %147 = vector.shape_cast %146 : vector<1x1x128xf32> to vector<1x128xf32>
    %148 = vector.broadcast %147 : vector<1x128xf32> to vector<8x128xf32>
    %149 = arith.addf %145, %148 : vector<8x128xf32>
    %cst_83 = arith.constant 0.000000e+00 : f32
    %150 = vector.broadcast %cst_83 : f32 to vector<8x128xf32>
    %151 = arith.maximumf %149, %150 : vector<8x128xf32>
    %c0_84 = arith.constant 0 : index
    %c0_85 = arith.constant 0 : index
    %152 = vector.load %arg9[%c0_84, %c0_85] : memref<128x128xf32, #tpu.memory_space<vmem>>, vector<128x128xf32>
    %cst_86 = arith.constant dense<0.000000e+00> : vector<8x128xf32>
    %153 = tpu.matmul %151, %152, %cst_86 {dimension_numbers = #tpu.dot_dimension_numbers<[1], [0], [0], [1], [0, 0, 1, 1], [], []>} : vector<8x128xf32>, vector<128x128xf32>, vector<8x128xf32> -> vector<8x128xf32>
    %c0_87 = arith.constant 0 : index
    %c0_88 = arith.constant 0 : index
    %154 = vector.load %arg10[%c0_87, %c0_88] : memref<1x128xf32, #tpu.memory_space<vmem>>, vector<1x128xf32>
    %155 = vector.broadcast %154 : vector<1x128xf32> to vector<8x128xf32>
    %156 = arith.addf %153, %155 : vector<8x128xf32>
    %c0_89 = arith.constant 0 : index
    %c0_90 = arith.constant 0 : index
    %157 = vector.load %arg11[%c0_89, %c0_90] : memref<8x128xf32, #tpu.memory_space<vmem>>, vector<8x128xf32>
    tpu.vector_store %arg11[%c0_89, %c0_90], %156 {strides = array<i32>} : memref<8x128xf32, #tpu.memory_space<vmem>>, vector<8x128xf32>,
    return
  }
}

</mosaic_0001>

<llo_original>
// kernel: critic_forward.1
$region0: #{critic_forward.1}
  #allocation0 [shape = 'u32[]', space=smem, size = 0x4, offset = 0x4, fixed_abs, tag = 'smem constant byte address 0x4 - core index']
  #allocation1 [shape = 'u32[144,128]{1,0:T(1,128)}', space=vmem, size = 0x12000, scoped, tag = 'internal scratch']
  %s0 = inlined_call_operand.vmem [shape: f32[8,12], index: 0, kind: input, shape index: {}]
  %s1 = inlined_call_operand.vmem [shape: f32[8,4], index: 1, kind: input, shape index: {}]
  %s2 = inlined_call_operand.vmem [shape: f32[12,128], index: 2, kind: input, shape index: {}]
  %s3 = inlined_call_operand.vmem [shape: f32[4,128], index: 3, kind: input, shape index: {}]
  %s4 = inlined_call_operand.vmem [shape: f32[1,128], index: 4, kind: input, shape index: {}]
  %s5 = inlined_call_operand.hbm [shape: f32[4,128,128], index: 5, kind: input, shape index: {}]
  %s6 = inlined_call_operand.hbm [shape: f32[4,1,128], index: 6, kind: input, shape index: {}]
  %s7 = inlined_call_operand.vmem [shape: f32[4,1,128], index: 7, kind: input, shape index: {}]
  %s8 = inlined_call_operand.hbm [shape: f32[4,1,128], index: 8, kind: input, shape index: {}]
  %s9 = inlined_call_operand.hbm [shape: f32[128,128], index: 9, kind: input, shape index: {}]
  %s10 = inlined_call_operand.vmem [shape: f32[1,128], index: 10, kind: input, shape index: {}]
  %s11 = inlined_call_operand.vmem [shape: f32[8,128], index: 11, kind: output, shape index: {}]
  %s12 = sld [smem:[#allocation0]]
  $region70: #{critic_forward.1} parent=0
    _
  %s14 = ssub.s32 1, %s12
  %s15 = scalar_select 0, %s14, %s12
  $region1: #{critic_forward.1} parent=0
    #allocation2 [shape = 'u8[262144]{0}', space=vmem, size = 0x40000, scoped, tag = 'input window, operand 5, single buffered']
    #allocation3 [shape = 's32[1]{0}', space=sflag, size = 0x4, scoped, tag = 'scoped memory for critic_forward.1']
    #allocation4 [shape = 'u8[2048]{0}', space=vmem, size = 0x800, scoped, tag = 'input window, operand 6, single buffered']
    #allocation5 [shape = 's32[1]{0}', space=sflag, size = 0x4, scoped, tag = 'scoped memory for critic_forward.1']
    #allocation6 [shape = 'u8[2048]{0}', space=vmem, size = 0x800, scoped, tag = 'input window, operand 8, single buffered']
    #allocation7 [shape = 'u8[65536]{0}', space=vmem, size = 0x10000, scoped, tag = 'input window, operand 9, single buffered']
    #allocation8 [shape = 's32[1]{0}', space=sflag, size = 0x4, scoped, tag = 'scoped memory for critic_forward.1']
    %16 = vsyncpa [#allocation3], 0
    %17 = vsyncpa [#allocation5], 0
    %18 = vsyncpa [#allocation8], 0
    // Predicated region
    $region2: #{critic_forward.1} parent=1 // pred_check
      _
    $region3: #{critic_forward.1} parent=1 // pred_check_branch
      %20 = sbr.rel (0) target = $region5
    $region4: #{critic_forward.1} parent=1 // pred_region
      _
    $region5: #{critic_forward.1} parent=1 // pred_fallthru
      _
    // Predicated region
    $region6: #{critic_forward.1} parent=1 // pred_check
      _
    $region7: #{critic_forward.1} parent=1 // pred_check_branch
      %22 = sbr.rel (0) target = $region9
    $region8: #{critic_forward.1} parent=1 // pred_region
      _
    $region9: #{critic_forward.1} parent=1 // pred_fallthru
      _
    // Predicated region
    $region10: #{critic_forward.1} parent=1 // pred_check
      _
    $region11: #{critic_forward.1} parent=1 // pred_check_branch
      %24 = sbr.rel (0) target = $region13
    $region12: #{critic_forward.1} parent=1 // pred_region
      _
    $region13: #{critic_forward.1} parent=1 // pred_fallthru
      _
    // Predicated region
    $region14: #{critic_forward.1} parent=1 // pred_check
      _
    $region15: #{critic_forward.1} parent=1 // pred_check_branch
      %26 = sbr.rel (0) target = $region17
    $region16: #{critic_forward.1} parent=1 // pred_region
      _
    $region17: #{critic_forward.1} parent=1 // pred_fallthru
      _
    // Predicated region
    $region18: #{critic_forward.1} parent=1 // pred_check
      _
    $region19: #{critic_forward.1} parent=1 // pred_check_branch
      %28 = sbr.rel (0) target = $region21
    $region20: #{critic_forward.1} parent=1 // pred_region
      _
    $region21: #{critic_forward.1} parent=1 // pred_fallthru
      _
    // Predicated region
    $region22: #{critic_forward.1} parent=1 // pred_check
      _
    $region23: #{critic_forward.1} parent=1 // pred_check_branch
      %30 = sbr.rel (0) target = $region25
    $region24: #{critic_forward.1} parent=1 // pred_region
      %s32 = ssub.s32 8192, 8192
      %33 = vsyncadd [#allocation3], %s32
      %s34 = sshll.u32 [#allocation2], 4
      %s35 = int_to_ptr.vmem [resolvable:$true] %s34
      %40 = dma.hbm_to_vmem [thread:$0]  %s5, 8192, %s35, [#allocation3], 128, 128, 8
    $region25: #{critic_forward.1} parent=1 // pred_fallthru
      _
    // Predicated region
    $region26: #{critic_forward.1} parent=1 // pred_check
      _
    $region27: #{critic_forward.1} parent=1 // pred_check_branch
      %42 = sbr.rel (0) target = $region29
    $region28: #{critic_forward.1} parent=1 // pred_region
      %s44 = ssub.s32 64, 64
      %45 = vsyncadd [#allocation5], %s44
      %s46 = sshll.u32 [#allocation4], 4
      %s47 = int_to_ptr.vmem [resolvable:$true] %s46
      %52 = dma.hbm_to_vmem [thread:$0]  %s6, 64, %s47, [#allocation5], 16, 16, 1
    $region29: #{critic_forward.1} parent=1 // pred_fallthru
      _
    // Predicated region
    $region30: #{critic_forward.1} parent=1 // pred_check
      _
    $region31: #{critic_forward.1} parent=1 // pred_check_branch
      %54 = sbr.rel (0) target = $region33
    $region32: #{critic_forward.1} parent=1 // pred_region
      _
    $region33: #{critic_forward.1} parent=1 // pred_fallthru
      _
    // Predicated region
    $region34: #{critic_forward.1} parent=1 // pred_check
      _
    $region35: #{critic_forward.1} parent=1 // pred_check_branch
      %56 = sbr.rel (0) target = $region37
    $region36: #{critic_forward.1} parent=1 // pred_region
      %s58 = ssub.s32 64, 64
      %59 = vsyncadd [#allocation5], %s58
      %s60 = sshll.u32 [#allocation6], 4
      %s61 = int_to_ptr.vmem [resolvable:$true] %s60
      %66 = dma.hbm_to_vmem [thread:$0]  %s8, 64, %s61, [#allocation5], 16, 16, 1
    $region37: #{critic_forward.1} parent=1 // pred_fallthru
      _
    // Predicated region
    $region38: #{critic_forward.1} parent=1 // pred_check
      _
    $region39: #{critic_forward.1} parent=1 // pred_check_branch
      %68 = sbr.rel (0) target = $region41
    $region40: #{critic_forward.1} parent=1 // pred_region
      %s70 = ssub.s32 2048, 2048
      %71 = vsyncadd [#allocation8], %s70
      %s72 = sshll.u32 [#allocation7], 4
      %s73 = int_to_ptr.vmem [resolvable:$true] %s72
      %78 = dma.hbm_to_vmem [thread:$0]  %s9, 2048, %s73, [#allocation8], 128, 128, 8
    $region41: #{critic_forward.1} parent=1 // pred_fallthru
      _
    // Predicated region
    $region42: #{critic_forward.1} parent=1 // pred_check
      _
    $region43: #{critic_forward.1} parent=1 // pred_check_branch
      %80 = sbr.rel (0) target = $region45
    $region44: #{critic_forward.1} parent=1 // pred_region
      _
    $region45: #{critic_forward.1} parent=1 // pred_fallthru
      _
    // Predicated region
    $region46: #{critic_forward.1} parent=1 // pred_check
      _
    $region47: #{critic_forward.1} parent=1 // pred_check_branch
      %82 = sbr.rel (0) target = $region49
    $region48: #{critic_forward.1} parent=1 // pred_region
      %83 = dma.done [#allocation3], 8192
    $region49: #{critic_forward.1} parent=1 // pred_fallthru
      _
    // Predicated region
    $region50: #{critic_forward.1} parent=1 // pred_check
      _
    $region51: #{critic_forward.1} parent=1 // pred_check_branch
      %85 = sbr.rel (0) target = $region53
    $region52: #{critic_forward.1} parent=1 // pred_region
      %86 = dma.done [#allocation5], 64
    $region53: #{critic_forward.1} parent=1 // pred_fallthru
      _
    // Predicated region
    $region54: #{critic_forward.1} parent=1 // pred_check
      _
    $region55: #{critic_forward.1} parent=1 // pred_check_branch
      %88 = sbr.rel (0) target = $region57
    $region56: #{critic_forward.1} parent=1 // pred_region
      %89 = dma.done [#allocation5], 64
    $region57: #{critic_forward.1} parent=1 // pred_fallthru
      _
    // Predicated region
    $region58: #{critic_forward.1} parent=1 // pred_check
      _
    $region59: #{critic_forward.1} parent=1 // pred_check_branch
      %91 = sbr.rel (0) target = $region61
    $region60: #{critic_forward.1} parent=1 // pred_region
      %92 = dma.done [#allocation8], 2048
    $region61: #{critic_forward.1} parent=1 // pred_fallthru
      _
    %v93 = vld [vmem:[%s0] sm:$0xff]
    %v94 = vld [vmem:[%s2] sm:$0xff]
    %v95 = vld [vmem:[%s2 + $0x8] sm:$0xf]
    %v96 = vld [vmem:[%s1] sm:$0xff]
    %v97 = vld [vmem:[%s3] sm:$0xf]
    %vm98 = vcmask 31744
    %v100 = vsel %vm98, %v96, 0
    %vm102 = vcmask 1043456
    %v104 = vsel %vm102, %v97, 0
    %106 = vmatprep.subr.mxu0 0.0
    %107 = vmatpush1.msra.mxu0 %v104
    %108 = vmatprep.subr.mxu0 0.0
    %109 = vmatpush1.msra.mxu0 0.0
    %110 = vmatprep.subr.mxu0 0.0
    %111 = vmatpush1.msra.mxu0 0.0
    %112 = vmatprep.subr.mxu0 0.0
    %113 = vmatpush1.msra.mxu0 0.0
    %114 = vmatprep.subr.mxu0 0.0
    %115 = vmatpush1.msra.mxu0 0.0
    %116 = vmatprep.subr.mxu0 0.0
    %117 = vmatpush1.msra.mxu0 0.0
    %118 = vmatprep.subr.mxu0 0.0
    %119 = vmatpush1.msra.mxu0 0.0
    %120 = vmatprep.subr.mxu0 0.0
    %121 = vmatpush1.msra.mxu0 0.0
    %122 = vmatprep.subr.mxu0 0.0
    %123 = vmatpush1.msra.mxu0 0.0
    %124 = vmatprep.subr.mxu0 0.0
    %125 = vmatpush1.msra.mxu0 0.0
    %126 = vmatprep.subr.mxu0 0.0
    %127 = vmatpush1.msra.mxu0 0.0
    %128 = vmatprep.subr.mxu0 0.0
    %129 = vmatpush1.msra.mxu0 0.0
    %130 = vmatprep.subr.mxu0 0.0
    %131 = vmatpush1.msra.mxu0 0.0
    %132 = vmatprep.subr.mxu0 0.0
    %133 = vmatpush1.msra.mxu0 0.0
    %134 = vmatprep.subr.mxu0 0.0
    %135 = vmatpush1.msra.mxu0 0.0
    %136 = vmatprep.subr.mxu0 0.0
    %137 = vmatpush1.msra.mxu0 0.0
    %138 = vmatprep.subr.mxu0 0.0
    %139 = vmatpush1.msra.mxu0 0.0
    %140 = vmatprep.subr.mxu0 0.0
    %141 = vmatpush1.msra.mxu0 0.0
    %142 = vmatprep.subr.mxu0 0.0
    %143 = vmatpush1.msra.mxu0 0.0
    %144 = vmatprep.subr.mxu0 0.0
    %145 = vmatpush1.msra.mxu0 0.0
    %146 = vmatprep.subr.mxu0 0.0
    %147 = vmatpush1.msra.mxu0 0.0
    %148 = vmatprep.subr.mxu0 0.0
    %149 = vmatpush1.msra.mxu0 0.0
    %150 = vmatprep.subr.mxu0 0.0
    %151 = vmatpush1.msra.mxu0 0.0
    %152 = vmatprep.subr.mxu0 0.0
    %153 = vmatpush1.msra.mxu0 0.0
    %154 = vmatprep.subr.mxu0 0.0
    %155 = vmatpush1.msra.mxu0 0.0
    %156 = vmatprep.subr.mxu0 0.0
    %157 = vmatpush1.msra.mxu0 0.0
    %158 = vmatprep.subr.mxu0 0.0
    %159 = vmatpush1.msra.mxu0 0.0
    %160 = vmatprep.subr.mxu0 0.0
    %161 = vmatpush1.msra.mxu0 0.0
    %162 = vmatprep.subr.mxu0 0.0
    %163 = vmatpush1.msra.mxu0 0.0
    %164 = vmatprep.subr.mxu0 0.0
    %165 = vmatpush1.msra.mxu0 0.0
    %166 = vmatprep.subr.mxu0 0.0
    %167 = vmatpush1.msra.mxu0 0.0
    %168 = vmatprep.subr.mxu0 0.0
    %169 = vmatpush1.msra.mxu0 0.0
    %170 = vmatprep.mubr.f32.mxu0 0.0
    %171 = vmatmul.mubr.f32.gmra.mrb[0].mxu0 %v100
    %v172 = vpop.f32.mrb[0].mxu0
    %v173 = vadd.f32 0.0, %v172
    %v174 = vpop.f32.mrb[0].mxu0
    %175 = vdwg.mxu0
    %vm176 = vcmask 97280
    %v178 = vsel %vm176, %v93, 0
    %v181 = vsel %vm102, %v95, 0
    %183 = vmatprep.subr.mxu0 0.0
    %184 = vmatpush1.msra.mxu0 %v94
    %185 = vmatprep.subr.mxu0 0.0
    %186 = vmatpush1.msra.mxu0 %v181
    %187 = vmatprep.subr.mxu0 0.0
    %188 = vmatpush1.msra.mxu0 0.0
    %189 = vmatprep.subr.mxu0 0.0
    %190 = vmatpush1.msra.mxu0 0.0
    %191 = vmatprep.subr.mxu0 0.0
    %192 = vmatpush1.msra.mxu0 0.0
    %193 = vmatprep.subr.mxu0 0.0
    %194 = vmatpush1.msra.mxu0 0.0
    %195 = vmatprep.subr.mxu0 0.0
    %196 = vmatpush1.msra.mxu0 0.0
    %197 = vmatprep.subr.mxu0 0.0
    %198 = vmatpush1.msra.mxu0 0.0
    %199 = vmatprep.subr.mxu0 0.0
    %200 = vmatpush1.msra.mxu0 0.0
    %201 = vmatprep.subr.mxu0 0.0
    %202 = vmatpush1.msra.mxu0 0.0
    %203 = vmatprep.subr.mxu0 0.0
    %204 = vmatpush1.msra.mxu0 0.0
    %205 = vmatprep.subr.mxu0 0.0
    %206 = vmatpush1.msra.mxu0 0.0
    %207 = vmatprep.subr.mxu0 0.0
    %208 = vmatpush1.msra.mxu0 0.0
    %209 = vmatprep.subr.mxu0 0.0
    %210 = vmatpush1.msra.mxu0 0.0
    %211 = vmatprep.subr.mxu0 0.0
    %212 = vmatpush1.msra.mxu0 0.0
    %213 = vmatprep.subr.mxu0 0.0
    %214 = vmatpush1.msra.mxu0 0.0
    %215 = vmatprep.subr.mxu0 0.0
    %216 = vmatpush1.msra.mxu0 0.0
    %217 = vmatprep.subr.mxu0 0.0
    %218 = vmatpush1.msra.mxu0 0.0
    %219 = vmatprep.subr.mxu0 0.0
    %220 = vmatpush1.msra.mxu0 0.0
    %221 = vmatprep.subr.mxu0 0.0
    %222 = vmatpush1.msra.mxu0 0.0
    %223 = vmatprep.subr.mxu0 0.0
    %224 = vmatpush1.msra.mxu0 0.0
    %225 = vmatprep.subr.mxu0 0.0
    %226 = vmatpush1.msra.mxu0 0.0
    %227 = vmatprep.subr.mxu0 0.0
    %228 = vmatpush1.msra.mxu0 0.0
    %229 = vmatprep.subr.mxu0 0.0
    %230 = vmatpush1.msra.mxu0 0.0
    %231 = vmatprep.subr.mxu0 0.0
    %232 = vmatpush1.msra.mxu0 0.0
    %233 = vmatprep.subr.mxu0 0.0
    %234 = vmatpush1.msra.mxu0 0.0
    %235 = vmatprep.subr.mxu0 0.0
    %236 = vmatpush1.msra.mxu0 0.0
    %237 = vmatprep.subr.mxu0 0.0
    %238 = vmatpush1.msra.mxu0 0.0
    %239 = vmatprep.subr.mxu0 0.0
    %240 = vmatpush1.msra.mxu0 0.0
    %241 = vmatprep.subr.mxu0 0.0
    %242 = vmatpush1.msra.mxu0 0.0
    %243 = vmatprep.subr.mxu0 0.0
    %244 = vmatpush1.msra.mxu0 0.0
    %245 = vmatprep.subr.mxu0 0.0
    %246 = vmatpush1.msra.mxu0 0.0
    %247 = vmatprep.mubr.f32.mxu0 0.0
    %248 = vmatmul.mubr.f32.gmra.mrb[0].mxu0 %v178
    %v249 = vpop.f32.mrb[0].mxu0
    %v250 = vadd.f32 %v173, %v249
    %v251 = vpop.f32.mrb[0].mxu0
    %252 = vdwg.mxu0
    %v253 = vld [vmem:[%s4] sm:$0x1]
    %v255 = vlaneseq
    %v256 = vshrl.u32 %v255, 7
    %v257 = vsub.s32 0, %v256
    %v258 = vrot.slane %v253, %v257
    %v260 = vadd.f32 %v250, %v258
    %v261 = vmax.f32 %v260, 0.0
    %v262 = vld [vmem:[#allocation2] sm:$0xff]
    %v263 = vld [vmem:[#allocation2 + $0x8] sm:$0xff]
    %v264 = vld [vmem:[#allocation2 + $0x10] sm:$0xff]
    %v265 = vld [vmem:[#allocation2 + $0x18] sm:$0xff]
    %v266 = vld [vmem:[#allocation2 + $0x20] sm:$0xff]
    %v267 = vld [vmem:[#allocation2 + $0x28] sm:$0xff]
    %v268 = vld [vmem:[#allocation2 + $0x30] sm:$0xff]
    %v269 = vld [vmem:[#allocation2 + $0x38] sm:$0xff]
    %v270 = vld [vmem:[#allocation2 + $0x40] sm:$0xff]
    %v271 = vld [vmem:[#allocation2 + $0x48] sm:$0xff]
    %v272 = vld [vmem:[#allocation2 + $0x50] sm:$0xff]
    %v273 = vld [vmem:[#allocation2 + $0x58] sm:$0xff]
    %v274 = vld [vmem:[#allocation2 + $0x60] sm:$0xff]
    %v275 = vld [vmem:[#allocation2 + $0x68] sm:$0xff]
    %v276 = vld [vmem:[#allocation2 + $0x70] sm:$0xff]
    %v277 = vld [vmem:[#allocation2 + $0x78] sm:$0xff]
    %v278 = vld [vmem:[#allocation4] sm:$0x1]
    %v280 = vlaneseq
    %v281 = vshrl.u32 %v280, 7
    %v282 = vsub.s32 0, %v281
    %v283 = vrot.slane %v278, %v282
    %285 = vmatprep.subr.mxu0 0.0
    %286 = vmatpush1.msra.mxu0 %v262
    %287 = vmatprep.subr.mxu0 0.0
    %288 = vmatpush1.msra.mxu0 %v263
    %289 = vmatprep.subr.mxu0 0.0
    %290 = vmatpush1.msra.mxu0 %v264
    %291 = vmatprep.subr.mxu0 0.0
    %292 = vmatpush1.msra.mxu0 %v265
    %293 = vmatprep.subr.mxu0 0.0
    %294 = vmatpush1.msra.mxu0 %v266
    %295 = vmatprep.subr.mxu0 0.0
    %296 = vmatpush1.msra.mxu0 %v267
    %297 = vmatprep.subr.mxu0 0.0
    %298 = vmatpush1.msra.mxu0 %v268
    %299 = vmatprep.subr.mxu0 0.0
    %300 = vmatpush1.msra.mxu0 %v269
    %301 = vmatprep.subr.mxu0 0.0
    %302 = vmatpush1.msra.mxu0 %v270
    %303 = vmatprep.subr.mxu0 0.0
    %304 = vmatpush1.msra.mxu0 %v271
    %305 = vmatprep.subr.mxu0 0.0
    %306 = vmatpush1.msra.mxu0 %v272
    %307 = vmatprep.subr.mxu0 0.0
    %308 = vmatpush1.msra.mxu0 %v273
    %309 = vmatprep.subr.mxu0 0.0
    %310 = vmatpush1.msra.mxu0 %v274
    %311 = vmatprep.subr.mxu0 0.0
    %312 = vmatpush1.msra.mxu0 %v275
    %313 = vmatprep.subr.mxu0 0.0
    %314 = vmatpush1.msra.mxu0 %v276
    %315 = vmatprep.subr.mxu0 0.0
    %316 = vmatpush1.msra.mxu0 %v277
    %317 = vmatprep.subr.mxu0 0.0
    %318 = vmatpush1.msra.mxu0 0.0
    %319 = vmatprep.subr.mxu0 0.0
    %320 = vmatpush1.msra.mxu0 0.0
    %321 = vmatprep.subr.mxu0 0.0
    %322 = vmatpush1.msra.mxu0 0.0
    %323 = vmatprep.subr.mxu0 0.0
    %324 = vmatpush1.msra.mxu0 0.0
    %325 = vmatprep.subr.mxu0 0.0
    %326 = vmatpush1.msra.mxu0 0.0
    %327 = vmatprep.subr.mxu0 0.0
    %328 = vmatpush1.msra.mxu0 0.0
    %329 = vmatprep.subr.mxu0 0.0
    %330 = vmatpush1.msra.mxu0 0.0
    %331 = vmatprep.subr.mxu0 0.0
    %332 = vmatpush1.msra.mxu0 0.0
    %333 = vmatprep.subr.mxu0 0.0
    %334 = vmatpush1.msra.mxu0 0.0
    %335 = vmatprep.subr.mxu0 0.0
    %336 = vmatpush1.msra.mxu0 0.0
    %337 = vmatprep.subr.mxu0 0.0
    %338 = vmatpush1.msra.mxu0 0.0
    %339 = vmatprep.subr.mxu0 0.0
    %340 = vmatpush1.msra.mxu0 0.0
    %341 = vmatprep.subr.mxu0 0.0
    %342 = vmatpush1.msra.mxu0 0.0
    %343 = vmatprep.subr.mxu0 0.0
    %344 = vmatpush1.msra.mxu0 0.0
    %345 = vmatprep.subr.mxu0 0.0
    %346 = vmatpush1.msra.mxu0 0.0
    %347 = vmatprep.subr.mxu0 0.0
    %348 = vmatpush1.msra.mxu0 0.0
    %349 = vmatprep.mubr.f32.mxu0 0.0
    %350 = vmatmul.mubr.f32.gmra.mrb[0].mxu0 %v261
    %v351 = vpop.f32.mrb[0].mxu0
    %v352 = vadd.f32 %v283, %v351
    %v353 = vpop.f32.mrb[0].mxu0
    %354 = vdwg.mxu0
    %v355 = vrot.slane %v352, 4
    %v356 = vadd.f32 %v352, %v355
    %v357 = vrot.slane %v356, 2
    %v358 = vadd.f32 %v356, %v357
    %v359 = vrot.slane %v358, 1
    %v360 = vadd.f32 %v358, %v359
    %v361 = vmul.f32 %v352, %v352
    %v362 = vrot.slane %v361, 4
    %v363 = vadd.f32 %v361, %v362
    %v364 = vrot.slane %v363, 2
    %v365 = vadd.f32 %v363, %v364
    %v366 = vrot.slane %v365, 1
    %v367 = vadd.f32 %v365, %v366
    %v368 = vmul.f32 %v360, 0.125
    %v369 = vmul.f32 %v367, 0.125
    %v370 = vmul.f32 %v368, %v368
    %v371 = vsub.f32 %v369, %v370
    %v372 = vsub.f32 %v352, %v368
    %v373 = vadd.f32 %v371, 1e-05
    %v374 = vrsqrt.pop %v373
    %v375 = vmul.f32 %v372, %v374
    %v376 = vld [vmem:[%s7] sm:$0x1]
    %v378 = vlaneseq
    %v379 = vshrl.u32 %v378, 7
    %v380 = vsub.s32 0, %v379
    %v381 = vrot.slane %v376, %v380
    %v383 = vmul.f32 %v375, %v381
    %v384 = vld [vmem:[#allocation6] sm:$0x1]
    %v386 = vlaneseq
    %v387 = vshrl.u32 %v386, 7
    %v388 = vsub.s32 0, %v387
    %v389 = vrot.slane %v384, %v388
    %v391 = vadd.f32 %v383, %v389
    %v392 = vmax.f32 %v391, 0.0
    %s393 = scalar_lea.vmem [#allocation2], 128
    %v394 = vld [vmem:[%s393] sm:$0xff]
    %v395 = vld [vmem:[%s393 + $0x8] sm:$0xff]
    %v396 = vld [vmem:[%s393 + $0x10] sm:$0xff]
    %v397 = vld [vmem:[%s393 + $0x18] sm:$0xff]
    %v398 = vld [vmem:[%s393 + $0x20] sm:$0xff]
    %v399 = vld [vmem:[%s393 + $0x28] sm:$0xff]
    %v400 = vld [vmem:[%s393 + $0x30] sm:$0xff]
    %v401 = vld [vmem:[%s393 + $0x38] sm:$0xff]
    %v402 = vld [vmem:[%s393 + $0x40] sm:$0xff]
    %v403 = vld [vmem:[%s393 + $0x48] sm:$0xff]
    %v404 = vld [vmem:[%s393 + $0x50] sm:$0xff]
    %v405 = vld [vmem:[%s393 + $0x58] sm:$0xff]
    %v406 = vld [vmem:[%s393 + $0x60] sm:$0xff]
    %v407 = vld [vmem:[%s393 + $0x68] sm:$0xff]
    %v408 = vld [vmem:[%s393 + $0x70] sm:$0xff]
    %v409 = vld [vmem:[%s393 + $0x78] sm:$0xff]
    %s410 = scalar_lea.vmem [#allocation4], 1
    %v411 = vld [vmem:[%s410] sm:$0x1]
    %v413 = vlaneseq
    %v414 = vshrl.u32 %v413, 7
    %v415 = vsub.s32 0, %v414
    %v416 = vrot.slane %v411, %v415
    %418 = vmatprep.subr.mxu0 0.0
    %419 = vmatpush1.msra.mxu0 %v394
    %420 = vmatprep.subr.mxu0 0.0
    %421 = vmatpush1.msra.mxu0 %v395
    %422 = vmatprep.subr.mxu0 0.0
    %423 = vmatpush1.msra.mxu0 %v396
    %424 = vmatprep.subr.mxu0 0.0
    %425 = vmatpush1.msra.mxu0 %v397
    %426 = vmatprep.subr.mxu0 0.0
    %427 = vmatpush1.msra.mxu0 %v398
    %428 = vmatprep.subr.mxu0 0.0
    %429 = vmatpush1.msra.mxu0 %v399
    %430 = vmatprep.subr.mxu0 0.0
    %431 = vmatpush1.msra.mxu0 %v400
    %432 = vmatprep.subr.mxu0 0.0
    %433 = vmatpush1.msra.mxu0 %v401
    %434 = vmatprep.subr.mxu0 0.0
    %435 = vmatpush1.msra.mxu0 %v402
    %436 = vmatprep.subr.mxu0 0.0
    %437 = vmatpush1.msra.mxu0 %v403
    %438 = vmatprep.subr.mxu0 0.0
    %439 = vmatpush1.msra.mxu0 %v404
    %440 = vmatprep.subr.mxu0 0.0
    %441 = vmatpush1.msra.mxu0 %v405
    %442 = vmatprep.subr.mxu0 0.0
    %443 = vmatpush1.msra.mxu0 %v406
    %444 = vmatprep.subr.mxu0 0.0
    %445 = vmatpush1.msra.mxu0 %v407
    %446 = vmatprep.subr.mxu0 0.0
    %447 = vmatpush1.msra.mxu0 %v408
    %448 = vmatprep.subr.mxu0 0.0
    %449 = vmatpush1.msra.mxu0 %v409
    %450 = vmatprep.subr.mxu0 0.0
    %451 = vmatpush1.msra.mxu0 0.0
    %452 = vmatprep.subr.mxu0 0.0
    %453 = vmatpush1.msra.mxu0 0.0
    %454 = vmatprep.subr.mxu0 0.0
    %455 = vmatpush1.msra.mxu0 0.0
    %456 = vmatprep.subr.mxu0 0.0
    %457 = vmatpush1.msra.mxu0 0.0
    %458 = vmatprep.subr.mxu0 0.0
    %459 = vmatpush1.msra.mxu0 0.0
    %460 = vmatprep.subr.mxu0 0.0
    %461 = vmatpush1.msra.mxu0 0.0
    %462 = vmatprep.subr.mxu0 0.0
    %463 = vmatpush1.msra.mxu0 0.0
    %464 = vmatprep.subr.mxu0 0.0
    %465 = vmatpush1.msra.mxu0 0.0
    %466 = vmatprep.subr.mxu0 0.0
    %467 = vmatpush1.msra.mxu0 0.0
    %468 = vmatprep.subr.mxu0 0.0
    %469 = vmatpush1.msra.mxu0 0.0
    %470 = vmatprep.subr.mxu0 0.0
    %471 = vmatpush1.msra.mxu0 0.0
    %472 = vmatprep.subr.mxu0 0.0
    %473 = vmatpush1.msra.mxu0 0.0
    %474 = vmatprep.subr.mxu0 0.0
    %475 = vmatpush1.msra.mxu0 0.0
    %476 = vmatprep.subr.mxu0 0.0
    %477 = vmatpush1.msra.mxu0 0.0
    %478 = vmatprep.subr.mxu0 0.0
    %479 = vmatpush1.msra.mxu0 0.0
    %480 = vmatprep.subr.mxu0 0.0
    %481 = vmatpush1.msra.mxu0 0.0
    %482 = vmatprep.mubr.f32.mxu0 0.0
    %483 = vmatmul.mubr.f32.gmra.mrb[0].mxu0 %v392
    %v484 = vpop.f32.mrb[0].mxu0
    %v485 = vadd.f32 %v416, %v484
    %v486 = vpop.f32.mrb[0].mxu0
    %487 = vdwg.mxu0
    %v488 = vrot.slane %v485, 4
    %v489 = vadd.f32 %v485, %v488
    %v490 = vrot.slane %v489, 2
    %v491 = vadd.f32 %v489, %v490
    %v492 = vrot.slane %v491, 1
    %v493 = vadd.f32 %v491, %v492
    %v494 = vmul.f32 %v485, %v485
    %v495 = vrot.slane %v494, 4
    %v496 = vadd.f32 %v494, %v495
    %v497 = vrot.slane %v496, 2
    %v498 = vadd.f32 %v496, %v497
    %v499 = vrot.slane %v498, 1
    %v500 = vadd.f32 %v498, %v499
    %v501 = vmul.f32 %v493, 0.125
    %v502 = vmul.f32 %v500, 0.125
    %v503 = vmul.f32 %v501, %v501
    %v504 = vsub.f32 %v502, %v503
    %v505 = vsub.f32 %v485, %v501
    %v506 = vadd.f32 %v504, 1e-05
    %v507 = vrsqrt.pop %v506
    %v508 = vmul.f32 %v505, %v507
    %s509 = scalar_lea.vmem %s7, 1
    %v510 = vld [vmem:[%s509] sm:$0x1]
    %v512 = vlaneseq
    %v513 = vshrl.u32 %v512, 7
    %v514 = vsub.s32 0, %v513
    %v515 = vrot.slane %v510, %v514
    %v517 = vmul.f32 %v508, %v515
    %s518 = scalar_lea.vmem [#allocation6], 1
    %v519 = vld [vmem:[%s518] sm:$0x1]
    %v521 = vlaneseq
    %v522 = vshrl.u32 %v521, 7
    %v523 = vsub.s32 0, %v522
    %v524 = vrot.slane %v519, %v523
    %v526 = vadd.f32 %v517, %v524
    %v527 = vmax.f32 %v526, 0.0
    %s528 = scalar_lea.vmem [#allocation2], 256
    %v529 = vld [vmem:[%s528] sm:$0xff]
    %v530 = vld [vmem:[%s528 + $0x8] sm:$0xff]
    %v531 = vld [vmem:[%s528 + $0x10] sm:$0xff]
    %v532 = vld [vmem:[%s528 + $0x18] sm:$0xff]
    %v533 = vld [vmem:[%s528 + $0x20] sm:$0xff]
    %v534 = vld [vmem:[%s528 + $0x28] sm:$0xff]
    %v535 = vld [vmem:[%s528 + $0x30] sm:$0xff]
    %v536 = vld [vmem:[%s528 + $0x38] sm:$0xff]
    %v537 = vld [vmem:[%s528 + $0x40] sm:$0xff]
    %v538 = vld [vmem:[%s528 + $0x48] sm:$0xff]
    %v539 = vld [vmem:[%s528 + $0x50] sm:$0xff]
    %v540 = vld [vmem:[%s528 + $0x58] sm:$0xff]
    %v541 = vld [vmem:[%s528 + $0x60] sm:$0xff]
    %v542 = vld [vmem:[%s528 + $0x68] sm:$0xff]
    %v543 = vld [vmem:[%s528 + $0x70] sm:$0xff]
    %v544 = vld [vmem:[%s528 + $0x78] sm:$0xff]
    %s545 = scalar_lea.vmem [#allocation4], 2
    %v546 = vld [vmem:[%s545] sm:$0x1]
    %v548 = vlaneseq
    %v549 = vshrl.u32 %v548, 7
    %v550 = vsub.s32 0, %v549
    %v551 = vrot.slane %v546, %v550
    %553 = vmatprep.subr.mxu0 0.0
    %554 = vmatpush1.msra.mxu0 %v529
    %555 = vmatprep.subr.mxu0 0.0
    %556 = vmatpush1.msra.mxu0 %v530
    %557 = vmatprep.subr.mxu0 0.0
    %558 = vmatpush1.msra.mxu0 %v531
    %559 = vmatprep.subr.mxu0 0.0
    %560 = vmatpush1.msra.mxu0 %v532
    %561 = vmatprep.subr.mxu0 0.0
    %562 = vmatpush1.msra.mxu0 %v533
    %563 = vmatprep.subr.mxu0 0.0
    %564 = vmatpush1.msra.mxu0 %v534
    %565 = vmatprep.subr.mxu0 0.0
    %566 = vmatpush1.msra.mxu0 %v535
    %567 = vmatprep.subr.mxu0 0.0
    %568 = vmatpush1.msra.mxu0 %v536
    %569 = vmatprep.subr.mxu0 0.0
    %570 = vmatpush1.msra.mxu0 %v537
    %571 = vmatprep.subr.mxu0 0.0
    %572 = vmatpush1.msra.mxu0 %v538
    %573 = vmatprep.subr.mxu0 0.0
    %574 = vmatpush1.msra.mxu0 %v539
    %575 = vmatprep.subr.mxu0 0.0
    %576 = vmatpush1.msra.mxu0 %v540
    %577 = vmatprep.subr.mxu0 0.0
    %578 = vmatpush1.msra.mxu0 %v541
    %579 = vmatprep.subr.mxu0 0.0
    %580 = vmatpush1.msra.mxu0 %v542
    %581 = vmatprep.subr.mxu0 0.0
    %582 = vmatpush1.msra.mxu0 %v543
    %583 = vmatprep.subr.mxu0 0.0
    %584 = vmatpush1.msra.mxu0 %v544
    %585 = vmatprep.subr.mxu0 0.0
    %586 = vmatpush1.msra.mxu0 0.0
    %587 = vmatprep.subr.mxu0 0.0
    %588 = vmatpush1.msra.mxu0 0.0
    %589 = vmatprep.subr.mxu0 0.0
    %590 = vmatpush1.msra.mxu0 0.0
    %591 = vmatprep.subr.mxu0 0.0
    %592 = vmatpush1.msra.mxu0 0.0
    %593 = vmatprep.subr.mxu0 0.0
    %594 = vmatpush1.msra.mxu0 0.0
    %595 = vmatprep.subr.mxu0 0.0
    %596 = vmatpush1.msra.mxu0 0.0
    %597 = vmatprep.subr.mxu0 0.0
    %598 = vmatpush1.msra.mxu0 0.0
    %599 = vmatprep.subr.mxu0 0.0
    %600 = vmatpush1.msra.mxu0 0.0
    %601 = vmatprep.subr.mxu0 0.0
    %602 = vmatpush1.msra.mxu0 0.0
    %603 = vmatprep.subr.mxu0 0.0
    %604 = vmatpush1.msra.mxu0 0.0
    %605 = vmatprep.subr.mxu0 0.0
    %606 = vmatpush1.msra.mxu0 0.0
    %607 = vmatprep.subr.mxu0 0.0
    %608 = vmatpush1.msra.mxu0 0.0
    %609 = vmatprep.subr.mxu0 0.0
    %610 = vmatpush1.msra.mxu0 0.0
    %611 = vmatprep.subr.mxu0 0.0
    %612 = vmatpush1.msra.mxu0 0.0
    %613 = vmatprep.subr.mxu0 0.0
    %614 = vmatpush1.msra.mxu0 0.0
    %615 = vmatprep.subr.mxu0 0.0
    %616 = vmatpush1.msra.mxu0 0.0
    %617 = vmatprep.mubr.f32.mxu0 0.0
    %618 = vmatmul.mubr.f32.gmra.mrb[0].mxu0 %v527
    %v619 = vpop.f32.mrb[0].mxu0
    %v620 = vadd.f32 %v551, %v619
    %v621 = vpop.f32.mrb[0].mxu0
    %622 = vdwg.mxu0
    %v623 = vrot.slane %v620, 4
    %v624 = vadd.f32 %v620, %v623
    %v625 = vrot.slane %v624, 2
    %v626 = vadd.f32 %v624, %v625
    %v627 = vrot.slane %v626, 1
    %v628 = vadd.f32 %v626, %v627
    %v629 = vmul.f32 %v620, %v620
    %v630 = vrot.slane %v629, 4
    %v631 = vadd.f32 %v629, %v630
    %v632 = vrot.slane %v631, 2
    %v633 = vadd.f32 %v631, %v632
    %v634 = vrot.slane %v633, 1
    %v635 = vadd.f32 %v633, %v634
    %v636 = vmul.f32 %v628, 0.125
    %v637 = vmul.f32 %v635, 0.125
    %v638 = vmul.f32 %v636, %v636
    %v639 = vsub.f32 %v637, %v638
    %v640 = vsub.f32 %v620, %v636
    %v641 = vadd.f32 %v639, 1e-05
    %v642 = vrsqrt.pop %v641
    %v643 = vmul.f32 %v640, %v642
    %s644 = scalar_lea.vmem %s7, 2
    %v645 = vld [vmem:[%s644] sm:$0x1]
    %v647 = vlaneseq
    %v648 = vshrl.u32 %v647, 7
    %v649 = vsub.s32 0, %v648
    %v650 = vrot.slane %v645, %v649
    %v652 = vmul.f32 %v643, %v650
    %s653 = scalar_lea.vmem [#allocation6], 2
    %v654 = vld [vmem:[%s653] sm:$0x1]
    %v656 = vlaneseq
    %v657 = vshrl.u32 %v656, 7
    %v658 = vsub.s32 0, %v657
    %v659 = vrot.slane %v654, %v658
    %v661 = vadd.f32 %v652, %v659
    %v662 = vmax.f32 %v661, 0.0
    %s663 = scalar_lea.vmem [#allocation2], 384
    %v664 = vld [vmem:[%s663] sm:$0xff]
    %v665 = vld [vmem:[%s663 + $0x8] sm:$0xff]
    %v666 = vld [vmem:[%s663 + $0x10] sm:$0xff]
    %v667 = vld [vmem:[%s663 + $0x18] sm:$0xff]
    %v668 = vld [vmem:[%s663 + $0x20] sm:$0xff]
    %v669 = vld [vmem:[%s663 + $0x28] sm:$0xff]
    %v670 = vld [vmem:[%s663 + $0x30] sm:$0xff]
    %v671 = vld [vmem:[%s663 + $0x38] sm:$0xff]
    %v672 = vld [vmem:[%s663 + $0x40] sm:$0xff]
    %v673 = vld [vmem:[%s663 + $0x48] sm:$0xff]
    %v674 = vld [vmem:[%s663 + $0x50] sm:$0xff]
    %v675 = vld [vmem:[%s663 + $0x58] sm:$0xff]
    %v676 = vld [vmem:[%s663 + $0x60] sm:$0xff]
    %v677 = vld [vmem:[%s663 + $0x68] sm:$0xff]
    %v678 = vld [vmem:[%s663 + $0x70] sm:$0xff]
    %v679 = vld [vmem:[%s663 + $0x78] sm:$0xff]
    %s680 = scalar_lea.vmem [#allocation4], 3
    %v681 = vld [vmem:[%s680] sm:$0x1]
    %v683 = vlaneseq
    %v684 = vshrl.u32 %v683, 7
    %v685 = vsub.s32 0, %v684
    %v686 = vrot.slane %v681, %v685
    %688 = vmatprep.subr.mxu0 0.0
    %689 = vmatpush1.msra.mxu0 %v664
    %690 = vmatprep.subr.mxu0 0.0
    %691 = vmatpush1.msra.mxu0 %v665
    %692 = vmatprep.subr.mxu0 0.0
    %693 = vmatpush1.msra.mxu0 %v666
    %694 = vmatprep.subr.mxu0 0.0
    %695 = vmatpush1.msra.mxu0 %v667
    %696 = vmatprep.subr.mxu0 0.0
    %697 = vmatpush1.msra.mxu0 %v668
    %698 = vmatprep.subr.mxu0 0.0
    %699 = vmatpush1.msra.mxu0 %v669
    %700 = vmatprep.subr.mxu0 0.0
    %701 = vmatpush1.msra.mxu0 %v670
    %702 = vmatprep.subr.mxu0 0.0
    %703 = vmatpush1.msra.mxu0 %v671
    %704 = vmatprep.subr.mxu0 0.0
    %705 = vmatpush1.msra.mxu0 %v672
    %706 = vmatprep.subr.mxu0 0.0
    %707 = vmatpush1.msra.mxu0 %v673
    %708 = vmatprep.subr.mxu0 0.0
    %709 = vmatpush1.msra.mxu0 %v674
    %710 = vmatprep.subr.mxu0 0.0
    %711 = vmatpush1.msra.mxu0 %v675
    %712 = vmatprep.subr.mxu0 0.0
    %713 = vmatpush1.msra.mxu0 %v676
    %714 = vmatprep.subr.mxu0 0.0
    %715 = vmatpush1.msra.mxu0 %v677
    %716 = vmatprep.subr.mxu0 0.0
    %717 = vmatpush1.msra.mxu0 %v678
    %718 = vmatprep.subr.mxu0 0.0
    %719 = vmatpush1.msra.mxu0 %v679
    %720 = vmatprep.subr.mxu0 0.0
    %721 = vmatpush1.msra.mxu0 0.0
    %722 = vmatprep.subr.mxu0 0.0
    %723 = vmatpush1.msra.mxu0 0.0
    %724 = vmatprep.subr.mxu0 0.0
    %725 = vmatpush1.msra.mxu0 0.0
    %726 = vmatprep.subr.mxu0 0.0
    %727 = vmatpush1.msra.mxu0 0.0
    %728 = vmatprep.subr.mxu0 0.0
    %729 = vmatpush1.msra.mxu0 0.0
    %730 = vmatprep.subr.mxu0 0.0
    %731 = vmatpush1.msra.mxu0 0.0
    %732 = vmatprep.subr.mxu0 0.0
    %733 = vmatpush1.msra.mxu0 0.0
    %734 = vmatprep.subr.mxu0 0.0
    %735 = vmatpush1.msra.mxu0 0.0
    %736 = vmatprep.subr.mxu0 0.0
    %737 = vmatpush1.msra.mxu0 0.0
    %738 = vmatprep.subr.mxu0 0.0
    %739 = vmatpush1.msra.mxu0 0.0
    %740 = vmatprep.subr.mxu0 0.0
    %741 = vmatpush1.msra.mxu0 0.0
    %742 = vmatprep.subr.mxu0 0.0
    %743 = vmatpush1.msra.mxu0 0.0
    %744 = vmatprep.subr.mxu0 0.0
    %745 = vmatpush1.msra.mxu0 0.0
    %746 = vmatprep.subr.mxu0 0.0
    %747 = vmatpush1.msra.mxu0 0.0
    %748 = vmatprep.subr.mxu0 0.0
    %749 = vmatpush1.msra.mxu0 0.0
    %750 = vmatprep.subr.mxu0 0.0
    %751 = vmatpush1.msra.mxu0 0.0
    %752 = vmatprep.mubr.f32.mxu0 0.0
    %753 = vmatmul.mubr.f32.gmra.mrb[0].mxu0 %v662
    %v754 = vpop.f32.mrb[0].mxu0
    %v755 = vadd.f32 %v686, %v754
    %v756 = vpop.f32.mrb[0].mxu0
    %757 = vdwg.mxu0
    %v758 = vrot.slane %v755, 4
    %v759 = vadd.f32 %v755, %v758
    %v760 = vrot.slane %v759, 2
    %v761 = vadd.f32 %v759, %v760
    %v762 = vrot.slane %v761, 1
    %v763 = vadd.f32 %v761, %v762
    %v764 = vmul.f32 %v755, %v755
    %v765 = vrot.slane %v764, 4
    %v766 = vadd.f32 %v764, %v765
    %v767 = vrot.slane %v766, 2
    %v768 = vadd.f32 %v766, %v767
    %v769 = vrot.slane %v768, 1
    %v770 = vadd.f32 %v768, %v769
    %v771 = vmul.f32 %v763, 0.125
    %v772 = vmul.f32 %v770, 0.125
    %v773 = vmul.f32 %v771, %v771
    %v774 = vsub.f32 %v772, %v773
    %v775 = vsub.f32 %v755, %v771
    %v776 = vadd.f32 %v774, 1e-05
    %v777 = vrsqrt.pop %v776
    %v778 = vmul.f32 %v775, %v777
    %s779 = scalar_lea.vmem %s7, 3
    %v780 = vld [vmem:[%s779] sm:$0x1]
    %v782 = vlaneseq
    %v783 = vshrl.u32 %v782, 7
    %v784 = vsub.s32 0, %v783
    %v785 = vrot.slane %v780, %v784
    %v787 = vmul.f32 %v778, %v785
    %s788 = scalar_lea.vmem [#allocation6], 3
    %v789 = vld [vmem:[%s788] sm:$0x1]
    %v791 = vlaneseq
    %v792 = vshrl.u32 %v791, 7
    %v793 = vsub.s32 0, %v792
    %v794 = vrot.slane %v789, %v793
    %v796 = vadd.f32 %v787, %v794
    %v797 = vmax.f32 %v796, 0.0
    %v798 = vld [vmem:[#allocation7] sm:$0xff]
    %v799 = vld [vmem:[#allocation7 + $0x8] sm:$0xff]
    %v800 = vld [vmem:[#allocation7 + $0x10] sm:$0xff]
    %v801 = vld [vmem:[#allocation7 + $0x18] sm:$0xff]
    %v802 = vld [vmem:[#allocation7 + $0x20] sm:$0xff]
    %v803 = vld [vmem:[#allocation7 + $0x28] sm:$0xff]
    %v804 = vld [vmem:[#allocation7 + $0x30] sm:$0xff]
    %v805 = vld [vmem:[#allocation7 + $0x38] sm:$0xff]
    %v806 = vld [vmem:[#allocation7 + $0x40] sm:$0xff]
    %v807 = vld [vmem:[#allocation7 + $0x48] sm:$0xff]
    %v808 = vld [vmem:[#allocation7 + $0x50] sm:$0xff]
    %v809 = vld [vmem:[#allocation7 + $0x58] sm:$0xff]
    %v810 = vld [vmem:[#allocation7 + $0x60] sm:$0xff]
    %v811 = vld [vmem:[#allocation7 + $0x68] sm:$0xff]
    %v812 = vld [vmem:[#allocation7 + $0x70] sm:$0xff]
    %v813 = vld [vmem:[#allocation7 + $0x78] sm:$0xff]
    %v814 = vld [vmem:[%s10] sm:$0x1]
    %v816 = vlaneseq
    %v817 = vshrl.u32 %v816, 7
    %v818 = vsub.s32 0, %v817
    %v819 = vrot.slane %v814, %v818
    %821 = vmatprep.subr.mxu0 0.0
    %822 = vmatpush1.msra.mxu0 %v798
    %823 = vmatprep.subr.mxu0 0.0
    %824 = vmatpush1.msra.mxu0 %v799
    %825 = vmatprep.subr.mxu0 0.0
    %826 = vmatpush1.msra.mxu0 %v800
    %827 = vmatprep.subr.mxu0 0.0
    %828 = vmatpush1.msra.mxu0 %v801
    %829 = vmatprep.subr.mxu0 0.0
    %830 = vmatpush1.msra.mxu0 %v802
    %831 = vmatprep.subr.mxu0 0.0
    %832 = vmatpush1.msra.mxu0 %v803
    %833 = vmatprep.subr.mxu0 0.0
    %834 = vmatpush1.msra.mxu0 %v804
    %835 = vmatprep.subr.mxu0 0.0
    %836 = vmatpush1.msra.mxu0 %v805
    %837 = vmatprep.subr.mxu0 0.0
    %838 = vmatpush1.msra.mxu0 %v806
    %839 = vmatprep.subr.mxu0 0.0
    %840 = vmatpush1.msra.mxu0 %v807
    %841 = vmatprep.subr.mxu0 0.0
    %842 = vmatpush1.msra.mxu0 %v808
    %843 = vmatprep.subr.mxu0 0.0
    %844 = vmatpush1.msra.mxu0 %v809
    %845 = vmatprep.subr.mxu0 0.0
    %846 = vmatpush1.msra.mxu0 %v810
    %847 = vmatprep.subr.mxu0 0.0
    %848 = vmatpush1.msra.mxu0 %v811
    %849 = vmatprep.subr.mxu0 0.0
    %850 = vmatpush1.msra.mxu0 %v812
    %851 = vmatprep.subr.mxu0 0.0
    %852 = vmatpush1.msra.mxu0 %v813
    %853 = vmatprep.subr.mxu0 0.0
    %854 = vmatpush1.msra.mxu0 0.0
    %855 = vmatprep.subr.mxu0 0.0
    %856 = vmatpush1.msra.mxu0 0.0
    %857 = vmatprep.subr.mxu0 0.0
    %858 = vmatpush1.msra.mxu0 0.0
    %859 = vmatprep.subr.mxu0 0.0
    %860 = vmatpush1.msra.mxu0 0.0
    %861 = vmatprep.subr.mxu0 0.0
    %862 = vmatpush1.msra.mxu0 0.0
    %863 = vmatprep.subr.mxu0 0.0
    %864 = vmatpush1.msra.mxu0 0.0
    %865 = vmatprep.subr.mxu0 0.0
    %866 = vmatpush1.msra.mxu0 0.0
    %867 = vmatprep.subr.mxu0 0.0
    %868 = vmatpush1.msra.mxu0 0.0
    %869 = vmatprep.subr.mxu0 0.0
    %870 = vmatpush1.msra.mxu0 0.0
    %871 = vmatprep.subr.mxu0 0.0
    %872 = vmatpush1.msra.mxu0 0.0
    %873 = vmatprep.subr.mxu0 0.0
    %874 = vmatpush1.msra.mxu0 0.0
    %875 = vmatprep.subr.mxu0 0.0
    %876 = vmatpush1.msra.mxu0 0.0
    %877 = vmatprep.subr.mxu0 0.0
    %878 = vmatpush1.msra.mxu0 0.0
    %879 = vmatprep.subr.mxu0 0.0
    %880 = vmatpush1.msra.mxu0 0.0
    %881 = vmatprep.subr.mxu0 0.0
    %882 = vmatpush1.msra.mxu0 0.0
    %883 = vmatprep.subr.mxu0 0.0
    %884 = vmatpush1.msra.mxu0 0.0
    %885 = vmatprep.mubr.f32.mxu0 0.0
    %886 = vmatmul.mubr.f32.gmra.mrb[0].mxu0 %v797
    %v887 = vpop.f32.mrb[0].mxu0
    %v888 = vadd.f32 %v819, %v887
    %v889 = vpop.f32.mrb[0].mxu0
    %890 = vdwg.mxu0
    %891 = vst [vmem:[%s11] sm:$0xff] %v888
    // Predicated region
    $region62: #{critic_forward.1} parent=1 // pred_check
      _
    $region63: #{critic_forward.1} parent=1 // pred_check_branch
      %893 = sbr.rel (0) target = $region65
    $region64: #{critic_forward.1} parent=1 // pred_region
      _
    $region65: #{critic_forward.1} parent=1 // pred_fallthru
      _
    // Predicated region
    $region66: #{critic_forward.1} parent=1 // pred_check
      _
    $region67: #{critic_forward.1} parent=1 // pred_check_branch
      %895 = sbr.rel (0) target = $region69
    $region68: #{critic_forward.1} parent=1 // pred_region
      _
    $region69: #{critic_forward.1} parent=1 // pred_fallthru
      _
    %896 = vsyncpa [#allocation3], 1
    %897 = vsyncpa [#allocation5], 1
    %898 = vsyncpa [#allocation8], 1

</llo_original>
